<compile_context>
chip_gen: v6e
topology: v6e:2x2x1
jax: 0.10.0
libtpu: 0.0.40
codegen_flags: <defaults>
</compile_context>

<pallas_src>
import functools

import jax
import jax.numpy as jnp
from jax.experimental import pallas as pl
from jax.experimental.pallas import tpu as pltpu

BN_EPS = 1e-5
_VMEM_LIMIT = 32 * 1024 * 1024
# Collapse the K grid axis when the full-K weight block (bf16) and the A block
# stay under these budgets (worst case in resnet18: 4608x512 bf16 = 4.5 MiB).
_FULLK_WEIGHT_BUDGET = 8 * 1024 * 1024
_FULLK_ABLOCK_BUDGET = 8 * 1024 * 1024

try:
    _IS_V7X = "v7" in jax.devices()[0].device_kind.lower()
except Exception:  # pragma: no cover
    _IS_V7X = False


def _round_up(x, m):
    return (x + m - 1) // m * m


# ----------------------------- Pallas kernels ------------------------------

def _mm_fullk_kernel(*refs, relu, has_res):
    """Single-step GEMM (full K in one block) + affine (+ residual) (+ ReLU)."""
    if has_res:
        a_ref, b_ref, scale_ref, shift_ref, res_ref, o_ref = refs
    else:
        a_ref, b_ref, scale_ref, shift_ref, o_ref = refs
        res_ref = None
    y = jnp.dot(a_ref[...], b_ref[...], preferred_element_type=jnp.float32)
    y = y * scale_ref[...] + shift_ref[...]
    if res_ref is not None:
        y = y + res_ref[...].astype(jnp.float32)
    if relu:
        y = jnp.maximum(y, 0.0)
    o_ref[...] = y.astype(o_ref.dtype)


def _mm_ktiled_kernel(*refs, relu, has_res):
    """K-tiled fallback: f32 accumulator scratch, direct write at k == 0."""
    if has_res:
        a_ref, b_ref, scale_ref, shift_ref, res_ref, o_ref, acc_ref = refs
    else:
        a_ref, b_ref, scale_ref, shift_ref, o_ref, acc_ref = refs
        res_ref = None

    k = pl.program_id(2)
    prod = jnp.dot(a_ref[...], b_ref[...], preferred_element_type=jnp.float32)

    @pl.when(k == 0)
    def _():
        acc_ref[...] = prod

    @pl.when(k != 0)
    def _():
        acc_ref[...] += prod

    @pl.when(k == pl.num_programs(2) - 1)
    def _():
        y = acc_ref[...] * scale_ref[...] + shift_ref[...]
        if res_ref is not None:
            y = y + res_ref[...].astype(jnp.float32)
        if relu:
            y = jnp.maximum(y, 0.0)
        o_ref[...] = y.astype(o_ref.dtype)


def _max_taps_kernel(x_ref, o_ref):
    # Elementwise max tree over the tap axis, in native dtype (bf16 VALU on
    # v6e/v7x; Mosaic inserts the cast path on v5e).
    m = x_ref[0]
    for t in range(1, x_ref.shape[0]):
        m = jnp.maximum(m, x_ref[t])
    o_ref[...] = m.astype(o_ref.dtype)


def _head_kernel(x_ref, w1_ref, b1_ref, w2_ref, b2_ref, o_ref, *, inv_hw):
    # Fused: global average pool -> Linear(512,256) -> ReLU -> Linear(256,nc).
    feats = jnp.sum(x_ref[...].astype(jnp.float32), axis=1) * inv_hw   # (N, C)
    h1 = jnp.dot(feats.astype(jnp.bfloat16), w1_ref[...],
                 preferred_element_type=jnp.float32) + b1_ref[...]
    h1 = jnp.maximum(h1, 0.0)
    logits = jnp.dot(h1.astype(jnp.bfloat16), w2_ref[...],
                     preferred_element_type=jnp.float32) + b2_ref[...]
    o_ref[...] = logits


# ------------------------------ GEMM wrapper --------------------------------

def matmul_affine(a, pw, *, relu, residual=None, out_dtype=jnp.bfloat16,
                  return_padded=False):
    """relu_maybe((a @ B) * scale + shift [+ residual]).

    a: (M, K) activation. pw: prepared weight dict (pre-padded bf16 'b'
    (Kp, Np), f32 'scale'/'shift' (1, Np), original 'K', 'N').
    residual: optional (M, N) or already-padded (Mp, Np) tensor fused in the
    epilogue. return_padded=True returns the padded (Mp, Np) buffer directly.
    """
    M, K = a.shape
    assert K == pw['K'], (K, pw['K'])
    b_p, sc_p, sh_p = pw['b'], pw['scale'], pw['shift']
    Kp, Np = b_p.shape
    N = pw['N']

    # M tiling: biggest tile that fits (grid collapses to a single M tile for
    # every conv in this net); only tile when Mp would exceed 512.
    Mp = _round_up(M, 16)
    if Mp > 512:
        tm = 512
        Mp = _round_up(M, tm)
    else:
        tm = Mp

    # N tiling: one full-N tile; on v7x split N once so both TCs get work.
    tn = Np
    if _IS_V7X and Np >= 256 and (Np // 2) % 128 == 0:
        tn = Np // 2

    a_bf = a if a.dtype == jnp.bfloat16 else a.astype(jnp.bfloat16)
    if a_bf.shape != (Mp, Kp):
        a_bf = jnp.pad(a_bf, ((0, Mp - M), (0, Kp - K)))

    has_res = residual is not None
    r_p = None
    if has_res:
        r_p = residual if residual.dtype == jnp.bfloat16 \
            else residual.astype(jnp.bfloat16)
        if r_p.shape != (Mp, Np):
            rM, rN = r_p.shape
            r_p = jnp.pad(r_p, ((0, Mp - rM), (0, Np - rN)))

    collapse_k = (Kp * Np * 2 <= _FULLK_WEIGHT_BUDGET
                  and tm * Kp * 2 <= _FULLK_ABLOCK_BUDGET)

    if collapse_k:
        inputs = [a_bf, b_p, sc_p, sh_p]
        in_specs = [
            pl.BlockSpec((tm, Kp), lambda i, j: (i, 0)),
            pl.BlockSpec((Kp, tn), lambda i, j: (0, j)),
            pl.BlockSpec((1, tn), lambda i, j: (0, j)),
            pl.BlockSpec((1, tn), lambda i, j: (0, j)),
        ]
        if has_res:
            inputs.append(r_p)
            in_specs.append(pl.BlockSpec((tm, tn), lambda i, j: (i, j)))
        out = pl.pallas_call(
            functools.partial(_mm_fullk_kernel, relu=relu, has_res=has_res),
            out_shape=jax.ShapeDtypeStruct((Mp, Np), out_dtype),
            grid_spec=pltpu.PrefetchScalarGridSpec(
                num_scalar_prefetch=0,
                grid=(Mp // tm, Np // tn),
                in_specs=in_specs,
                out_specs=pl.BlockSpec((tm, tn), lambda i, j: (i, j)),
            ),
            compiler_params=pltpu.CompilerParams(
                dimension_semantics=("parallel", "parallel"),
                vmem_limit_bytes=_VMEM_LIMIT),
        )(*inputs)
    else:
        tk = 256 if Kp % 256 == 0 else 128
        inputs = [a_bf, b_p, sc_p, sh_p]
        in_specs = [
            pl.BlockSpec((tm, tk), lambda i, j, k: (i, k)),
            pl.BlockSpec((tk, tn), lambda i, j, k: (k, j)),
            pl.BlockSpec((1, tn), lambda i, j, k: (0, j)),
            pl.BlockSpec((1, tn), lambda i, j, k: (0, j)),
        ]
        if has_res:
            inputs.append(r_p)
            in_specs.append(pl.BlockSpec((tm, tn), lambda i, j, k: (i, j)))
        out = pl.pallas_call(
            functools.partial(_mm_ktiled_kernel, relu=relu, has_res=has_res),
            out_shape=jax.ShapeDtypeStruct((Mp, Np), out_dtype),
            grid_spec=pltpu.PrefetchScalarGridSpec(
                num_scalar_prefetch=0,
                grid=(Mp // tm, Np // tn, Kp // tk),
                in_specs=in_specs,
                out_specs=pl.BlockSpec((tm, tn), lambda i, j, k: (i, j)),
                scratch_shapes=[pltpu.VMEM((tm, tn), jnp.float32)],
            ),
            compiler_params=pltpu.CompilerParams(
                dimension_semantics=("parallel", "parallel", "arbitrary"),
                vmem_limit_bytes=_VMEM_LIMIT),
        )(*inputs)

    if return_padded:
        return out
    if (Mp, Np) == (M, N):
        return out
    return out[:M, :N]


# --------------------------- conv / pool plumbing ---------------------------

def im2col_nhwc(x, kh, kw, stride, pad):
    """x: NHWC -> A operand (N*Ho*Wo, kh*kw*C), tap-major then channel.

    Matches weight.transpose(2,3,1,0).reshape(kh*kw*C_in, C_out) ordering."""
    N, H, W, C = x.shape
    xp = jnp.pad(x, ((0, 0), (pad, pad), (pad, pad), (0, 0)))
    Ho = (H + 2 * pad - kh) // stride + 1
    Wo = (W + 2 * pad - kw) // stride + 1
    taps = []
    for i in range(kh):
        for j in range(kw):
            taps.append(xp[:,
                           i:i + stride * (Ho - 1) + 1:stride,
                           j:j + stride * (Wo - 1) + 1:stride, :])
    patches = jnp.stack(taps, axis=3)          # (N, Ho, Wo, kh*kw, C)
    return patches.reshape(N * Ho * Wo, kh * kw * C), Ho, Wo


def conv_bn(x, pc, *, stride, pad, relu, residual=None,
            out_dtype=jnp.bfloat16, return_padded2d=False):
    """Conv2d (no bias) + folded eval BN (+ optional fused residual/ReLU).

    x: NHWC. Returns NHWC, or the padded (Mp, Np) 2-D GEMM buffer when
    return_padded2d=True (used to feed a fused residual without re-padding)."""
    N = x.shape[0]
    a, Ho, Wo = im2col_nhwc(x, pc['kh'], pc['kw'], stride, pad)
    y = matmul_affine(a, pc, relu=relu, residual=residual,
                      out_dtype=out_dtype, return_padded=return_padded2d)
    if return_padded2d:
        return y
    return y.reshape(N, Ho, Wo, pc['N'])


def maxpool_3x3_s2_p1(x):
    """3x3 stride-2 pad-1 maxpool, NHWC in/out, lane-dense gridded kernel."""
    N, H, W, C = x.shape
    neg = jnp.finfo(x.dtype).min
    xp = jnp.pad(x, ((0, 0), (1, 1), (1, 1), (0, 0)), constant_values=neg)
    Ho = (H + 2 - 3) // 2 + 1
    Wo = (W + 2 - 3) // 2 + 1
    taps = []
    for i in range(3):
        for j in range(3):
            taps.append(xp[:, i:i + 2 * (Ho - 1) + 1:2,
                           j:j + 2 * (Wo - 1) + 1:2, :])
    M = N * Ho * Wo
    stacked = jnp.stack(taps, axis=0).reshape(9, M, C)

    # Lane-dense output: fold rows into lanes so the store path is 128-wide
    # (max is elementwise -> layout agnostic).
    Ml, Cl = M, C
    if C < 128 and 128 % C == 0 and M % (128 // C) == 0:
        f = 128 // C
        Ml, Cl = M // f, 128
        stacked = stacked.reshape(9, Ml, Cl)

    tm = min(1024, _round_up(Ml, 8))
    Mp = _round_up(Ml, tm)
    if Mp != Ml:
        stacked = jnp.pad(stacked, ((0, 0), (0, Mp - Ml), (0, 0)),
                          constant_values=neg)

    out = pl.pallas_call(
        _max_taps_kernel,
        out_shape=jax.ShapeDtypeStruct((Mp, Cl), x.dtype),
        grid_spec=pltpu.PrefetchScalarGridSpec(
            num_scalar_prefetch=0,
            grid=(Mp // tm,),
            in_specs=[pl.BlockSpec((9, tm, Cl), lambda i: (0, i, 0))],
            out_specs=pl.BlockSpec((tm, Cl), lambda i: (i, 0)),
        ),
        compiler_params=pltpu.CompilerParams(
            dimension_semantics=("parallel",),
            vmem_limit_bytes=_VMEM_LIMIT),
    )(stacked)
    return out[:Ml].reshape(N, Ho, Wo, C)


def classifier_head(h, fc1, fc2, num_classes):
    """Fused GAP + Linear(512,256) + ReLU + Linear(256,nc) in one pallas_call.

    Dropout layers of the original classifier are identity in eval mode."""
    N, H, W, C = h.shape
    HW = H * W
    assert fc1['b'].shape[0] == C, (fc1['b'].shape, C)
    assert fc2['b'].shape[0] == fc1['N'], (fc2['b'].shape, fc1['N'])
    x2 = h.reshape(N, HW, C)
    Nb = _round_up(max(N, 8), 8)
    if Nb != N:
        x2 = jnp.pad(x2, ((0, Nb - N), (0, 0), (0, 0)))
    Np2 = fc2['b'].shape[1]

    out = pl.pallas_call(
        functools.partial(_head_kernel, inv_hw=1.0 / HW),
        out_shape=jax.ShapeDtypeStruct((Nb, Np2), jnp.float32),
        grid_spec=pltpu.PrefetchScalarGridSpec(
            num_scalar_prefetch=0,
            grid=(1,),
            in_specs=[
                pl.BlockSpec((Nb, HW, C), lambda i: (0, 0, 0)),
                pl.BlockSpec(fc1['b'].shape, lambda i: (0, 0)),
                pl.BlockSpec(fc1['shift'].shape, lambda i: (0, 0)),
                pl.BlockSpec(fc2['b'].shape, lambda i: (0, 0)),
                pl.BlockSpec(fc2['shift'].shape, lambda i: (0, 0)),
            ],
            out_specs=pl.BlockSpec((Nb, Np2), lambda i: (0, 0)),
        ),
        compiler_params=pltpu.CompilerParams(
            dimension_semantics=("arbitrary",),
            vmem_limit_bytes=_VMEM_LIMIT),
    )(x2, fc1['b'], fc1['shift'], fc2['b'], fc2['shift'])
    return out[:N, :num_classes]


# ------------------------------ parameters ---------------------------------

def init_conv(key, c_out, c_in, k):
    fan_in = c_in * k * k
    return jax.random.normal(key, (c_out, c_in, k, k), jnp.float32) * \
        (2.0 / fan_in) ** 0.5


def init_bn(key, c):
    k1, k2, k3, k4 = jax.random.split(key, 4)
    gamma = 1.0 + 0.1 * jax.random.normal(k1, (c,), jnp.float32)
    beta = 0.1 * jax.random.normal(k2, (c,), jnp.float32)
    mean = 0.1 * jax.random.normal(k3, (c,), jnp.float32)
    var = 1.0 + 0.1 * jnp.abs(jax.random.normal(k4, (c,), jnp.float32))
    scale = gamma / jnp.sqrt(var + BN_EPS)
    shift = beta - mean * scale
    return scale, shift


def init_params(key, num_classes=2):
    keys = iter(jax.random.split(key, 128))
    p = {}
    p['conv1'] = init_conv(next(keys), 64, 3, 7)
    p['bn1'] = init_bn(next(keys), 64)
    cfg = [(64, 64, 1), (64, 128, 2), (128, 256, 2), (256, 512, 2)]
    layers = []
    for (c_in, c_out, stride) in cfg:
        blocks = []
        for b in range(2):  # resnet18: 2 BasicBlocks per stage
            s = stride if b == 0 else 1
            ci = c_in if b == 0 else c_out
            blk = {
                'conv1': init_conv(next(keys), c_out, ci, 3),
                'bn1': init_bn(next(keys), c_out),
                'conv2': init_conv(next(keys), c_out, c_out, 3),
                'bn2': init_bn(next(keys), c_out),
            }
            if s != 1 or ci != c_out:
                blk['down_conv'] = init_conv(next(keys), c_out, ci, 1)
                blk['down_bn'] = init_bn(next(keys), c_out)
            blocks.append((blk, s))
        layers.append(blocks)
    p['layers'] = layers
    # classifier: Dropout(0.3) -> Linear(512,256) -> ReLU -> Dropout(0.2)
    #             -> Linear(256,num_classes)
    k1, k2, k3, k4 = (next(keys) for _ in range(4))
    p['fc1_w'] = jax.random.normal(k1, (256, 512), jnp.float32) * (1.0 / 512) ** 0.5
    p['fc1_b'] = 0.01 * jax.random.normal(k2, (256,), jnp.float32)
    p['fc2_w'] = jax.random.normal(k3, (num_classes, 256), jnp.float32) * (1.0 / 256) ** 0.5
    p['fc2_b'] = 0.01 * jax.random.normal(k4, (num_classes,), jnp.float32)
    return p


def _prep_conv_bn(weight, scale, shift):
    """Fold to GEMM-ready form once: B=(kh*kw*C_in, C_out) bf16, padded."""
    c_out, c_in, kh, kw = weight.shape
    b = weight.transpose(2, 3, 1, 0).reshape(kh * kw * c_in, c_out)
    K, N = b.shape
    Kp, Np = _round_up(K, 128), _round_up(N, 128)
    return {
        'b': jnp.pad(b, ((0, Kp - K), (0, Np - N))).astype(jnp.bfloat16),
        'scale': jnp.pad(scale.astype(jnp.float32).reshape(1, N),
                         ((0, 0), (0, Np - N))),
        'shift': jnp.pad(shift.astype(jnp.float32).reshape(1, N),
                         ((0, 0), (0, Np - N))),
        'K': K, 'N': N, 'kh': kh, 'kw': kw,
    }


def _prep_linear(weight, bias):
    """PyTorch (out, in) Linear -> GEMM-ready bf16 B, identity scale, bias shift."""
    b = weight.T
    K, N = b.shape
    Kp, Np = _round_up(K, 128), _round_up(N, 128)
    return {
        'b': jnp.pad(b, ((0, Kp - K), (0, Np - N))).astype(jnp.bfloat16),
        'scale': jnp.pad(jnp.ones((1, N), jnp.float32), ((0, 0), (0, Np - N))),
        'shift': jnp.pad(bias.astype(jnp.float32).reshape(1, N),
                         ((0, 0), (0, Np - N))),
        'K': K, 'N': N, 'kh': 1, 'kw': 1,
    }


def prepare_params(raw):
    p = {'conv1': _prep_conv_bn(raw['conv1'], *raw['bn1'])}
    layers = []
    for blocks in raw['layers']:
        bl = []
        for blk, s in blocks:
            pb = {'conv1': _prep_conv_bn(blk['conv1'], *blk['bn1']),
                  'conv2': _prep_conv_bn(blk['conv2'], *blk['bn2'])}
            if 'down_conv' in blk:
                pb['down'] = _prep_conv_bn(blk['down_conv'], *blk['down_bn'])
            bl.append((pb, s))
        layers.append(bl)
    p['layers'] = layers
    p['fc1'] = _prep_linear(raw['fc1_w'], raw['fc1_b'])
    p['fc2'] = _prep_linear(raw['fc2_w'], raw['fc2_b'])
    p['num_classes'] = raw['fc2_w'].shape[0]
    return p


# -------------------------------- forward ----------------------------------

def basic_block(x, blk, stride):
    out = conv_bn(x, blk['conv1'], stride=stride, pad=1, relu=True)
    Nb, Ho, Wo, _ = out.shape
    if 'down' in blk:
        # Downsample identity comes back as the padded (Mp, Np) GEMM buffer,
        # consumed directly by conv2's fused residual epilogue (no slice /
        # reshape / re-pad round trip).
        identity = conv_bn(x, blk['down'], stride=stride, pad=0, relu=False,
                           return_padded2d=True)
    else:
        identity = x.reshape(Nb * Ho * Wo, x.shape[-1])
    # residual add + ReLU fused into conv2's GEMM epilogue
    return conv_bn(out, blk['conv2'], stride=1, pad=1, relu=True,
                   residual=identity)


def resnet_baseline_forward(pp, x_nchw):
    """x_nchw: (N, 3, H, W) float32 (PyTorch layout) -> logits (N, num_classes)."""
    # One-time layout/dtype conversion; everything else stays NHWC bf16.
    x = x_nchw.transpose(0, 2, 3, 1).astype(jnp.bfloat16)
    h = conv_bn(x, pp['conv1'], stride=2, pad=3, relu=True)
    h = maxpool_3x3_s2_p1(h)
    for blocks in pp['layers']:
        for blk, s in blocks:
            h = basic_block(h, blk, s)
    # timm resnet18 (num_classes=0) pooled features + classifier head, fused.
    return classifier_head(h, pp['fc1'], pp['fc2'], pp['num_classes'])


if __name__ == "__main__":
    key = jax.random.PRNGKey(0)
    kp, kx = jax.random.split(key)
    raw_params = init_params(kp, num_classes=2)
    params = prepare_params(raw_params)           # one-time fold/pad/bf16 cast
    x = jax.random.normal(kx, (2, 3, 32, 32), jnp.float32)  # NCHW like PyTorch
    out = resnet_baseline_forward(params, x)
    out = jax.block_until_ready(out)
    assert out.shape == (2, 2), out.shape
    assert jnp.all(jnp.isfinite(out))
    print("KERNEL_OK")
</pallas_src>

<mosaic_0001>
module attributes {stable_mosaic.version = 11 : i64} {
  func.func @_mm_fullk_kernel(%arg0: i32, %arg1: i32, %arg2: memref<512x256xbf16, #tpu.memory_space<vmem>>, %arg3: memref<256x128xbf16, #tpu.memory_space<vmem>>, %arg4: memref<1x128xf32, #tpu.memory_space<vmem>>, %arg5: memref<1x128xf32, #tpu.memory_space<vmem>>, %arg6: memref<512x128xbf16, #tpu.memory_space<vmem>>) attributes {dimension_semantics = [#tpu.dimension_semantics<parallel>, #tpu.dimension_semantics<parallel>], iteration_bounds = array<i64: 1, 1>, scalar_prefetch = 0 : i64, scratch_operands = 0 : i64, tpu.core_type = #tpu.core_type<tc>, window_params = [{transform_indices = @transform_0, window_bounds = array<i64: 512, 256>}, {transform_indices = @transform_1, window_bounds = array<i64: 256, 128>}, {transform_indices = @transform_2, window_bounds = array<i64: 1, 128>}, {transform_indices = @transform_3, window_bounds = array<i64: 1, 128>}, {transform_indices = @transform_4, window_bounds = array<i64: 512, 128>}]} {
    %c0 = arith.constant 0 : index
    %c0_0 = arith.constant 0 : index
    %0 = vector.load %arg2[%c0, %c0_0] : memref<512x256xbf16, #tpu.memory_space<vmem>>, vector<512x256xbf16>
    %c0_1 = arith.constant 0 : index
    %c0_2 = arith.constant 0 : index
    %1 = vector.load %arg3[%c0_1, %c0_2] : memref<256x128xbf16, #tpu.memory_space<vmem>>, vector<256x128xbf16>
    %cst = arith.constant dense<0.000000e+00> : vector<512x128xf32>
    %2 = tpu.matmul %0, %1, %cst {dimension_numbers = #tpu.dot_dimension_numbers<[1], [0], [0], [1], [0, 0, 1, 1], [], []>} : vector<512x256xbf16>, vector<256x128xbf16>, vector<512x128xf32> -> vector<512x128xf32>
    %c0_3 = arith.constant 0 : index
    %c0_4 = arith.constant 0 : index
    %3 = vector.load %arg4[%c0_3, %c0_4] : memref<1x128xf32, #tpu.memory_space<vmem>>, vector<1x128xf32>
    %4 = vector.broadcast %3 : vector<1x128xf32> to vector<512x128xf32>
    %5 = arith.mulf %2, %4 : vector<512x128xf32>
    %c0_5 = arith.constant 0 : index
    %c0_6 = arith.constant 0 : index
    %6 = vector.load %arg5[%c0_5, %c0_6] : memref<1x128xf32, #tpu.memory_space<vmem>>, vector<1x128xf32>
    %7 = vector.broadcast %6 : vector<1x128xf32> to vector<512x128xf32>
    %8 = arith.addf %5, %7 : vector<512x128xf32>
    %cst_7 = arith.constant 0.000000e+00 : f32
    %9 = vector.broadcast %cst_7 : f32 to vector<512x128xf32>
    %10 = arith.maximumf %8, %9 : vector<512x128xf32>
    %11 = arith.truncf %10 : vector<512x128xf32> to vector<512x128xbf16>
    %c0_8 = arith.constant 0 : index
    %c0_9 = arith.constant 0 : index
    %12 = vector.load %arg6[%c0_8, %c0_9] : memref<512x128xbf16, #tpu.memory_space<vmem>>, vector<512x128xbf16>
    tpu.vector_store %arg6[%c0_8, %c0_9], %11 {strides = array<i32>} : memref<512x128xbf16, #tpu.memory_space<vmem>>, vector<512x128xbf16>,
    return
  }
  func.func @transform_0(%arg0: i32, %arg1: i32) -> (i32, i32) {
    %c0_i32 = arith.constant 0 : i32
    %c0_i32_0 = arith.constant 0 : i32
    return %arg0, %c0_i32 : i32, i32
  }
  func.func @transform_1(%arg0: i32, %arg1: i32) -> (i32, i32) {
    %c0_i32 = arith.constant 0 : i32
    %c0_i32_0 = arith.constant 0 : i32
    return %c0_i32, %arg1 : i32, i32
  }
  func.func @transform_2(%arg0: i32, %arg1: i32) -> (i32, i32) {
    %c0_i32 = arith.constant 0 : i32
    %c0_i32_0 = arith.constant 0 : i32
    return %c0_i32, %arg1 : i32, i32
  }
  func.func @transform_3(%arg0: i32, %arg1: i32) -> (i32, i32) {
    %c0_i32 = arith.constant 0 : i32
    %c0_i32_0 = arith.constant 0 : i32
    return %c0_i32, %arg1 : i32, i32
  }
  func.func @transform_4(%arg0: i32, %arg1: i32) -> (i32, i32) {
    %c0_i32 = arith.constant 0 : i32
    return %arg0, %arg1 : i32, i32
  }
}

</mosaic_0001>

<llo_original>
// kernel: tpu_custom_call.1
$region0: #{tpu_custom_call.1}
  #allocation0 [shape = 'u32[]', space=smem, size = 0x4, offset = 0x4, fixed_abs, tag = 'smem constant byte address 0x4 - core index']
  #allocation1 [shape = 'u32[144,128]{1,0:T(1,128)}', space=vmem, size = 0x12000, scoped, tag = 'internal scratch']
  %s0 = inlined_call_operand.hbm [shape: bf16[512,256], index: 0, kind: input, shape index: {}]
  %s1 = inlined_call_operand.hbm [shape: bf16[256,128], index: 1, kind: input, shape index: {}]
  %s2 = inlined_call_operand.vmem [shape: f32[1,128], index: 2, kind: input, shape index: {}]
  %s3 = inlined_call_operand.vmem [shape: f32[1,128], index: 3, kind: input, shape index: {}]
  %s4 = inlined_call_operand.hbm [shape: bf16[512,128], index: 4, kind: output, shape index: {}]
  %s5 = sld [smem:[#allocation0]]
  $region34: #{tpu_custom_call.1} parent=0
    _
  %s7 = ssub.s32 1, %s5
  %s8 = scalar_select 0, %s7, %s5
  $region1: #{tpu_custom_call.1} parent=0
    #allocation2 [shape = 'u8[262144]{0}', space=vmem, size = 0x40000, scoped, tag = 'input window, operand 0, single buffered']
    #allocation3 [shape = 's32[1]{0}', space=sflag, size = 0x4, scoped, tag = 'scoped memory for tpu_custom_call.1']
    #allocation4 [shape = 's32[1]{0}', space=sflag, size = 0x4, scoped, tag = 'scoped memory for tpu_custom_call.1']
    #allocation5 [shape = 'u8[65536]{0}', space=vmem, size = 0x10000, scoped, tag = 'input window, operand 1, single buffered']
    #allocation6 [shape = 's32[1]{0}', space=sflag, size = 0x4, scoped, tag = 'scoped memory for tpu_custom_call.1']
    #allocation7 [shape = 'u8[131072]{0}', space=vmem, size = 0x20000, scoped, tag = 'output window, operand 0, single buffered']
    %9 = vsyncpa [#allocation3], 0
    %10 = vsyncpa [#allocation6], 0
    %11 = vsyncpa [#allocation4], 0
    // Predicated region
    $region2: #{tpu_custom_call.1} parent=1 // pred_check
      _
    $region3: #{tpu_custom_call.1} parent=1 // pred_check_branch
      %13 = sbr.rel (0) target = $region5
    $region4: #{tpu_custom_call.1} parent=1 // pred_region
      %s15 = ssub.s32 8192, 8192
      %16 = vsyncadd [#allocation3], %s15
      %s17 = sshll.u32 [#allocation2], 4
      %s18 = int_to_ptr.vmem [resolvable:$true] %s17
      %23 = dma.hbm_to_vmem [thread:$0]  %s0, 8192, %s18, [#allocation3], 128, 128, 8
    $region5: #{tpu_custom_call.1} parent=1 // pred_fallthru
      _
    // Predicated region
    $region6: #{tpu_custom_call.1} parent=1 // pred_check
      _
    $region7: #{tpu_custom_call.1} parent=1 // pred_check_branch
      %25 = sbr.rel (0) target = $region9
    $region8: #{tpu_custom_call.1} parent=1 // pred_region
      %s27 = ssub.s32 2048, 2048
      %28 = vsyncadd [#allocation6], %s27
      %s29 = sshll.u32 [#allocation5], 4
      %s30 = int_to_ptr.vmem [resolvable:$true] %s29
      %35 = dma.hbm_to_vmem [thread:$0]  %s1, 2048, %s30, [#allocation6], 64, 64, 4
    $region9: #{tpu_custom_call.1} parent=1 // pred_fallthru
      _
    // Predicated region
    $region10: #{tpu_custom_call.1} parent=1 // pred_check
      _
    $region11: #{tpu_custom_call.1} parent=1 // pred_check_branch
      %37 = sbr.rel (0) target = $region13
    $region12: #{tpu_custom_call.1} parent=1 // pred_region
      _
    $region13: #{tpu_custom_call.1} parent=1 // pred_fallthru
      _
    // Predicated region
    $region14: #{tpu_custom_call.1} parent=1 // pred_check
      _
    $region15: #{tpu_custom_call.1} parent=1 // pred_check_branch
      %39 = sbr.rel (0) target = $region17
    $region16: #{tpu_custom_call.1} parent=1 // pred_region
      _
    $region17: #{tpu_custom_call.1} parent=1 // pred_fallthru
      _
    // Predicated region
    $region18: #{tpu_custom_call.1} parent=1 // pred_check
      _
    $region19: #{tpu_custom_call.1} parent=1 // pred_check_branch
      %41 = sbr.rel (0) target = $region21
    $region20: #{tpu_custom_call.1} parent=1 // pred_region
      %42 = dma.done [#allocation3], 8192
    $region21: #{tpu_custom_call.1} parent=1 // pred_fallthru
      _
    // Predicated region
    $region22: #{tpu_custom_call.1} parent=1 // pred_check
      _
    $region23: #{tpu_custom_call.1} parent=1 // pred_check_branch
      %44 = sbr.rel (0) target = $region25
    $region24: #{tpu_custom_call.1} parent=1 // pred_region
      %45 = dma.done [#allocation6], 2048
    $region25: #{tpu_custom_call.1} parent=1 // pred_fallthru
      _
    %v47 = vld [vmem:[#allocation2] sm:$0xff]
    %v48 = vld [vmem:[#allocation2 + $0x8] sm:$0xff]
    %v49 = vld [vmem:[#allocation2 + $0x10] sm:$0xff]
    %v50 = vld [vmem:[#allocation2 + $0x18] sm:$0xff]
    %v51 = vld [vmem:[#allocation2 + $0x20] sm:$0xff]
    %v52 = vld [vmem:[#allocation2 + $0x28] sm:$0xff]
    %v53 = vld [vmem:[#allocation2 + $0x30] sm:$0xff]
    %v54 = vld [vmem:[#allocation2 + $0x38] sm:$0xff]
    %v55 = vld [vmem:[#allocation2 + $0x40] sm:$0xff]
    %v56 = vld [vmem:[#allocation2 + $0x48] sm:$0xff]
    %v57 = vld [vmem:[#allocation2 + $0x50] sm:$0xff]
    %v58 = vld [vmem:[#allocation2 + $0x58] sm:$0xff]
    %v59 = vld [vmem:[#allocation2 + $0x60] sm:$0xff]
    %v60 = vld [vmem:[#allocation2 + $0x68] sm:$0xff]
    %v61 = vld [vmem:[#allocation2 + $0x70] sm:$0xff]
    %v62 = vld [vmem:[#allocation2 + $0x78] sm:$0xff]
    %v63 = vld [vmem:[#allocation2 + $0x80] sm:$0xff]
    %v64 = vld [vmem:[#allocation2 + $0x88] sm:$0xff]
    %v65 = vld [vmem:[#allocation2 + $0x90] sm:$0xff]
    %v66 = vld [vmem:[#allocation2 + $0x98] sm:$0xff]
    %v67 = vld [vmem:[#allocation2 + $0xa0] sm:$0xff]
    %v68 = vld [vmem:[#allocation2 + $0xa8] sm:$0xff]
    %v69 = vld [vmem:[#allocation2 + $0xb0] sm:$0xff]
    %v70 = vld [vmem:[#allocation2 + $0xb8] sm:$0xff]
    %v71 = vld [vmem:[#allocation2 + $0xc0] sm:$0xff]
    %v72 = vld [vmem:[#allocation2 + $0xc8] sm:$0xff]
    %v73 = vld [vmem:[#allocation2 + $0xd0] sm:$0xff]
    %v74 = vld [vmem:[#allocation2 + $0xd8] sm:$0xff]
    %v75 = vld [vmem:[#allocation2 + $0xe0] sm:$0xff]
    %v76 = vld [vmem:[#allocation2 + $0xe8] sm:$0xff]
    %v77 = vld [vmem:[#allocation2 + $0xf0] sm:$0xff]
    %v78 = vld [vmem:[#allocation2 + $0xf8] sm:$0xff]
    %v79 = vld [vmem:[#allocation2 + $0x100] sm:$0xff]
    %v80 = vld [vmem:[#allocation2 + $0x108] sm:$0xff]
    %v81 = vld [vmem:[#allocation2 + $0x110] sm:$0xff]
    %v82 = vld [vmem:[#allocation2 + $0x118] sm:$0xff]
    %v83 = vld [vmem:[#allocation2 + $0x120] sm:$0xff]
    %v84 = vld [vmem:[#allocation2 + $0x128] sm:$0xff]
    %v85 = vld [vmem:[#allocation2 + $0x130] sm:$0xff]
    %v86 = vld [vmem:[#allocation2 + $0x138] sm:$0xff]
    %v87 = vld [vmem:[#allocation2 + $0x140] sm:$0xff]
    %v88 = vld [vmem:[#allocation2 + $0x148] sm:$0xff]
    %v89 = vld [vmem:[#allocation2 + $0x150] sm:$0xff]
    %v90 = vld [vmem:[#allocation2 + $0x158] sm:$0xff]
    %v91 = vld [vmem:[#allocation2 + $0x160] sm:$0xff]
    %v92 = vld [vmem:[#allocation2 + $0x168] sm:$0xff]
    %v93 = vld [vmem:[#allocation2 + $0x170] sm:$0xff]
    %v94 = vld [vmem:[#allocation2 + $0x178] sm:$0xff]
    %v95 = vld [vmem:[#allocation2 + $0x180] sm:$0xff]
    %v96 = vld [vmem:[#allocation2 + $0x188] sm:$0xff]
    %v97 = vld [vmem:[#allocation2 + $0x190] sm:$0xff]
    %v98 = vld [vmem:[#allocation2 + $0x198] sm:$0xff]
    %v99 = vld [vmem:[#allocation2 + $0x1a0] sm:$0xff]
    %v100 = vld [vmem:[#allocation2 + $0x1a8] sm:$0xff]
    %v101 = vld [vmem:[#allocation2 + $0x1b0] sm:$0xff]
    %v102 = vld [vmem:[#allocation2 + $0x1b8] sm:$0xff]
    %v103 = vld [vmem:[#allocation2 + $0x1c0] sm:$0xff]
    %v104 = vld [vmem:[#allocation2 + $0x1c8] sm:$0xff]
    %v105 = vld [vmem:[#allocation2 + $0x1d0] sm:$0xff]
    %v106 = vld [vmem:[#allocation2 + $0x1d8] sm:$0xff]
    %v107 = vld [vmem:[#allocation2 + $0x1e0] sm:$0xff]
    %v108 = vld [vmem:[#allocation2 + $0x1e8] sm:$0xff]
    %v109 = vld [vmem:[#allocation2 + $0x1f0] sm:$0xff]
    %v110 = vld [vmem:[#allocation2 + $0x1f8] sm:$0xff]
    %v111 = vld [vmem:[#allocation5] sm:$0xf]
    %v112 = vld [vmem:[#allocation5 + $0x4] sm:$0xf]
    %v113 = vld [vmem:[#allocation5 + $0x8] sm:$0xf]
    %v114 = vld [vmem:[#allocation5 + $0xc] sm:$0xf]
    %v115 = vld [vmem:[#allocation5 + $0x10] sm:$0xf]
    %v116 = vld [vmem:[#allocation5 + $0x14] sm:$0xf]
    %v117 = vld [vmem:[#allocation5 + $0x18] sm:$0xf]
    %v118 = vld [vmem:[#allocation5 + $0x1c] sm:$0xf]
    %v119 = vld [vmem:[#allocation5 + $0x20] sm:$0xf]
    %v120 = vld [vmem:[#allocation5 + $0x24] sm:$0xf]
    %v121 = vld [vmem:[#allocation5 + $0x28] sm:$0xf]
    %v122 = vld [vmem:[#allocation5 + $0x2c] sm:$0xf]
    %v123 = vld [vmem:[#allocation5 + $0x30] sm:$0xf]
    %v124 = vld [vmem:[#allocation5 + $0x34] sm:$0xf]
    %v125 = vld [vmem:[#allocation5 + $0x38] sm:$0xf]
    %v126 = vld [vmem:[#allocation5 + $0x3c] sm:$0xf]
    %v127 = vld [vmem:[#allocation5 + $0x40] sm:$0xf]
    %v128 = vld [vmem:[#allocation5 + $0x44] sm:$0xf]
    %v129 = vld [vmem:[#allocation5 + $0x48] sm:$0xf]
    %v130 = vld [vmem:[#allocation5 + $0x4c] sm:$0xf]
    %v131 = vld [vmem:[#allocation5 + $0x50] sm:$0xf]
    %v132 = vld [vmem:[#allocation5 + $0x54] sm:$0xf]
    %v133 = vld [vmem:[#allocation5 + $0x58] sm:$0xf]
    %v134 = vld [vmem:[#allocation5 + $0x5c] sm:$0xf]
    %v135 = vld [vmem:[#allocation5 + $0x60] sm:$0xf]
    %v136 = vld [vmem:[#allocation5 + $0x64] sm:$0xf]
    %v137 = vld [vmem:[#allocation5 + $0x68] sm:$0xf]
    %v138 = vld [vmem:[#allocation5 + $0x6c] sm:$0xf]
    %v139 = vld [vmem:[#allocation5 + $0x70] sm:$0xf]
    %v140 = vld [vmem:[#allocation5 + $0x74] sm:$0xf]
    %v141 = vld [vmem:[#allocation5 + $0x78] sm:$0xf]
    %v142 = vld [vmem:[#allocation5 + $0x7c] sm:$0xf]
    %v207 = vunpack.c.l.b16 %v47
    %v208 = vunpack.c.h.b16 %v47
    %v209 = vunpack.c.l.b16 %v48
    %v210 = vunpack.c.h.b16 %v48
    %v211 = vunpack.c.l.b16 %v49
    %v212 = vunpack.c.h.b16 %v49
    %v213 = vunpack.c.l.b16 %v50
    %v214 = vunpack.c.h.b16 %v50
    %v215 = vunpack.c.l.b16 %v51
    %v216 = vunpack.c.h.b16 %v51
    %v217 = vunpack.c.l.b16 %v52
    %v218 = vunpack.c.h.b16 %v52
    %v219 = vunpack.c.l.b16 %v53
    %v220 = vunpack.c.h.b16 %v53
    %v221 = vunpack.c.l.b16 %v54
    %v222 = vunpack.c.h.b16 %v54
    %v223 = vunpack.c.l.b16 %v55
    %v224 = vunpack.c.h.b16 %v55
    %v225 = vunpack.c.l.b16 %v56
    %v226 = vunpack.c.h.b16 %v56
    %v227 = vunpack.c.l.b16 %v57
    %v228 = vunpack.c.h.b16 %v57
    %v229 = vunpack.c.l.b16 %v58
    %v230 = vunpack.c.h.b16 %v58
    %v231 = vunpack.c.l.b16 %v59
    %v232 = vunpack.c.h.b16 %v59
    %v233 = vunpack.c.l.b16 %v60
    %v234 = vunpack.c.h.b16 %v60
    %v235 = vunpack.c.l.b16 %v61
    %v236 = vunpack.c.h.b16 %v61
    %v237 = vunpack.c.l.b16 %v62
    %v238 = vunpack.c.h.b16 %v62
    %v239 = vunpack.c.l.b16 %v63
    %v240 = vunpack.c.h.b16 %v63
    %v241 = vunpack.c.l.b16 %v64
    %v242 = vunpack.c.h.b16 %v64
    %v243 = vunpack.c.l.b16 %v65
    %v244 = vunpack.c.h.b16 %v65
    %v245 = vunpack.c.l.b16 %v66
    %v246 = vunpack.c.h.b16 %v66
    %v247 = vunpack.c.l.b16 %v67
    %v248 = vunpack.c.h.b16 %v67
    %v249 = vunpack.c.l.b16 %v68
    %v250 = vunpack.c.h.b16 %v68
    %v251 = vunpack.c.l.b16 %v69
    %v252 = vunpack.c.h.b16 %v69
    %v253 = vunpack.c.l.b16 %v70
    %v254 = vunpack.c.h.b16 %v70
    %v255 = vunpack.c.l.b16 %v71
    %v256 = vunpack.c.h.b16 %v71
    %v257 = vunpack.c.l.b16 %v72
    %v258 = vunpack.c.h.b16 %v72
    %v259 = vunpack.c.l.b16 %v73
    %v260 = vunpack.c.h.b16 %v73
    %v261 = vunpack.c.l.b16 %v74
    %v262 = vunpack.c.h.b16 %v74
    %v263 = vunpack.c.l.b16 %v75
    %v264 = vunpack.c.h.b16 %v75
    %v265 = vunpack.c.l.b16 %v76
    %v266 = vunpack.c.h.b16 %v76
    %v267 = vunpack.c.l.b16 %v77
    %v268 = vunpack.c.h.b16 %v77
    %v269 = vunpack.c.l.b16 %v78
    %v270 = vunpack.c.h.b16 %v78
    %v271 = vunpack.c.l.b16 %v79
    %v272 = vunpack.c.h.b16 %v79
    %v273 = vunpack.c.l.b16 %v80
    %v274 = vunpack.c.h.b16 %v80
    %v275 = vunpack.c.l.b16 %v81
    %v276 = vunpack.c.h.b16 %v81
    %v277 = vunpack.c.l.b16 %v82
    %v278 = vunpack.c.h.b16 %v82
    %v279 = vunpack.c.l.b16 %v83
    %v280 = vunpack.c.h.b16 %v83
    %v281 = vunpack.c.l.b16 %v84
    %v282 = vunpack.c.h.b16 %v84
    %v283 = vunpack.c.l.b16 %v85
    %v284 = vunpack.c.h.b16 %v85
    %v285 = vunpack.c.l.b16 %v86
    %v286 = vunpack.c.h.b16 %v86
    %v287 = vunpack.c.l.b16 %v87
    %v288 = vunpack.c.h.b16 %v87
    %v289 = vunpack.c.l.b16 %v88
    %v290 = vunpack.c.h.b16 %v88
    %v291 = vunpack.c.l.b16 %v89
    %v292 = vunpack.c.h.b16 %v89
    %v293 = vunpack.c.l.b16 %v90
    %v294 = vunpack.c.h.b16 %v90
    %v295 = vunpack.c.l.b16 %v91
    %v296 = vunpack.c.h.b16 %v91
    %v297 = vunpack.c.l.b16 %v92
    %v298 = vunpack.c.h.b16 %v92
    %v299 = vunpack.c.l.b16 %v93
    %v300 = vunpack.c.h.b16 %v93
    %v301 = vunpack.c.l.b16 %v94
    %v302 = vunpack.c.h.b16 %v94
    %v303 = vunpack.c.l.b16 %v95
    %v304 = vunpack.c.h.b16 %v95
    %v305 = vunpack.c.l.b16 %v96
    %v306 = vunpack.c.h.b16 %v96
    %v307 = vunpack.c.l.b16 %v97
    %v308 = vunpack.c.h.b16 %v97
    %v309 = vunpack.c.l.b16 %v98
    %v310 = vunpack.c.h.b16 %v98
    %v311 = vunpack.c.l.b16 %v99
    %v312 = vunpack.c.h.b16 %v99
    %v313 = vunpack.c.l.b16 %v100
    %v314 = vunpack.c.h.b16 %v100
    %v315 = vunpack.c.l.b16 %v101
    %v316 = vunpack.c.h.b16 %v101
    %v317 = vunpack.c.l.b16 %v102
    %v318 = vunpack.c.h.b16 %v102
    %v319 = vunpack.c.l.b16 %v103
    %v320 = vunpack.c.h.b16 %v103
    %v321 = vunpack.c.l.b16 %v104
    %v322 = vunpack.c.h.b16 %v104
    %v323 = vunpack.c.l.b16 %v105
    %v324 = vunpack.c.h.b16 %v105
    %v325 = vunpack.c.l.b16 %v106
    %v326 = vunpack.c.h.b16 %v106
    %v327 = vunpack.c.l.b16 %v107
    %v328 = vunpack.c.h.b16 %v107
    %v329 = vunpack.c.l.b16 %v108
    %v330 = vunpack.c.h.b16 %v108
    %v331 = vunpack.c.l.b16 %v109
    %v332 = vunpack.c.h.b16 %v109
    %v333 = vunpack.c.l.b16 %v110
    %v334 = vunpack.c.h.b16 %v110
    %v335 = vpack.c.b16 %v209, %v207
    %v336 = vpack.c.b16 %v210, %v208
    %v337 = vpack.c.b16 %v213, %v211
    %v338 = vpack.c.b16 %v214, %v212
    %v339 = vpack.c.b16 %v217, %v215
    %v340 = vpack.c.b16 %v218, %v216
    %v341 = vpack.c.b16 %v221, %v219
    %v342 = vpack.c.b16 %v222, %v220
    %v343 = vpack.c.b16 %v225, %v223
    %v344 = vpack.c.b16 %v226, %v224
    %v345 = vpack.c.b16 %v229, %v227
    %v346 = vpack.c.b16 %v230, %v228
    %v347 = vpack.c.b16 %v233, %v231
    %v348 = vpack.c.b16 %v234, %v232
    %v349 = vpack.c.b16 %v237, %v235
    %v350 = vpack.c.b16 %v238, %v236
    %v351 = vpack.c.b16 %v241, %v239
    %v352 = vpack.c.b16 %v242, %v240
    %v353 = vpack.c.b16 %v245, %v243
    %v354 = vpack.c.b16 %v246, %v244
    %v355 = vpack.c.b16 %v249, %v247
    %v356 = vpack.c.b16 %v250, %v248
    %v357 = vpack.c.b16 %v253, %v251
    %v358 = vpack.c.b16 %v254, %v252
    %v359 = vpack.c.b16 %v257, %v255
    %v360 = vpack.c.b16 %v258, %v256
    %v361 = vpack.c.b16 %v261, %v259
    %v362 = vpack.c.b16 %v262, %v260
    %v363 = vpack.c.b16 %v265, %v263
    %v364 = vpack.c.b16 %v266, %v264
    %v365 = vpack.c.b16 %v269, %v267
    %v366 = vpack.c.b16 %v270, %v268
    %v367 = vpack.c.b16 %v273, %v271
    %v368 = vpack.c.b16 %v274, %v272
    %v369 = vpack.c.b16 %v277, %v275
    %v370 = vpack.c.b16 %v278, %v276
    %v371 = vpack.c.b16 %v281, %v279
    %v372 = vpack.c.b16 %v282, %v280
    %v373 = vpack.c.b16 %v285, %v283
    %v374 = vpack.c.b16 %v286, %v284
    %v375 = vpack.c.b16 %v289, %v287
    %v376 = vpack.c.b16 %v290, %v288
    %v377 = vpack.c.b16 %v293, %v291
    %v378 = vpack.c.b16 %v294, %v292
    %v379 = vpack.c.b16 %v297, %v295
    %v380 = vpack.c.b16 %v298, %v296
    %v381 = vpack.c.b16 %v301, %v299
    %v382 = vpack.c.b16 %v302, %v300
    %v383 = vpack.c.b16 %v305, %v303
    %v384 = vpack.c.b16 %v306, %v304
    %v385 = vpack.c.b16 %v309, %v307
    %v386 = vpack.c.b16 %v310, %v308
    %v387 = vpack.c.b16 %v313, %v311
    %v388 = vpack.c.b16 %v314, %v312
    %v389 = vpack.c.b16 %v317, %v315
    %v390 = vpack.c.b16 %v318, %v316
    %v391 = vpack.c.b16 %v321, %v319
    %v392 = vpack.c.b16 %v322, %v320
    %v393 = vpack.c.b16 %v325, %v323
    %v394 = vpack.c.b16 %v326, %v324
    %v395 = vpack.c.b16 %v329, %v327
    %v396 = vpack.c.b16 %v330, %v328
    %v397 = vpack.c.b16 %v333, %v331
    %v398 = vpack.c.b16 %v334, %v332
    %v495 = vunpack.c.l.b16 %v111
    %v496 = vunpack.c.l.b16 %v112
    %v497 = vunpack.c.l.b16 %v113
    %v498 = vunpack.c.l.b16 %v114
    %v499 = vunpack.c.l.b16 %v115
    %v500 = vunpack.c.l.b16 %v116
    %v501 = vunpack.c.l.b16 %v117
    %v502 = vunpack.c.l.b16 %v118
    %v503 = vunpack.c.l.b16 %v119
    %v504 = vunpack.c.l.b16 %v120
    %v505 = vunpack.c.l.b16 %v121
    %v506 = vunpack.c.l.b16 %v122
    %v507 = vunpack.c.l.b16 %v123
    %v508 = vunpack.c.l.b16 %v124
    %v509 = vunpack.c.l.b16 %v125
    %v510 = vunpack.c.l.b16 %v126
    %v511 = vunpack.c.l.b16 %v127
    %v512 = vunpack.c.l.b16 %v128
    %v513 = vunpack.c.l.b16 %v129
    %v514 = vunpack.c.l.b16 %v130
    %v515 = vunpack.c.l.b16 %v131
    %v516 = vunpack.c.l.b16 %v132
    %v517 = vunpack.c.l.b16 %v133
    %v518 = vunpack.c.l.b16 %v134
    %v519 = vunpack.c.l.b16 %v135
    %v520 = vunpack.c.l.b16 %v136
    %v521 = vunpack.c.l.b16 %v137
    %v522 = vunpack.c.l.b16 %v138
    %v523 = vunpack.c.l.b16 %v139
    %v524 = vunpack.c.l.b16 %v140
    %v525 = vunpack.c.l.b16 %v141
    %v526 = vunpack.c.l.b16 %v142
    %v527 = vpack.c.b16 %v496, %v495
    %v528 = vpack.c.b16 %v498, %v497
    %v529 = vpack.c.b16 %v500, %v499
    %v530 = vpack.c.b16 %v502, %v501
    %v531 = vpack.c.b16 %v504, %v503
    %v532 = vpack.c.b16 %v506, %v505
    %v533 = vpack.c.b16 %v508, %v507
    %v534 = vpack.c.b16 %v510, %v509
    %v535 = vpack.c.b16 %v512, %v511
    %v536 = vpack.c.b16 %v514, %v513
    %v537 = vpack.c.b16 %v516, %v515
    %v538 = vpack.c.b16 %v518, %v517
    %v539 = vpack.c.b16 %v520, %v519
    %v540 = vpack.c.b16 %v522, %v521
    %v541 = vpack.c.b16 %v524, %v523
    %v542 = vpack.c.b16 %v526, %v525
    %559 = vmatprep.subr.bf16.mxu0 0
    %560 = vmatpush1.bf16.msra.mxu0 %v534
    %561 = vmatprep.subr.bf16.mxu0 0
    %562 = vmatpush1.bf16.msra.mxu0 %v533
    %563 = vmatprep.subr.bf16.mxu0 0
    %564 = vmatpush1.bf16.msra.mxu0 %v532
    %565 = vmatprep.subr.bf16.mxu0 0
    %566 = vmatpush1.bf16.msra.mxu0 %v531
    %567 = vmatprep.subr.bf16.mxu0 0
    %568 = vmatpush1.bf16.msra.mxu0 %v530
    %569 = vmatprep.subr.bf16.mxu0 0
    %570 = vmatpush1.bf16.msra.mxu0 %v529
    %571 = vmatprep.subr.bf16.mxu0 0
    %572 = vmatpush1.bf16.msra.mxu0 %v528
    %573 = vmatprep.subr.bf16.mxu0 0
    %574 = vmatpush1.bf16.msra.mxu0 %v527
    %575 = vmatprep.subr.bf16.mxu0 0
    %576 = vmatpush2.bf16.msra.mxu0 %v542
    %577 = vmatprep.subr.bf16.mxu0 0
    %578 = vmatpush2.bf16.msra.mxu0 %v541
    %579 = vmatprep.subr.bf16.mxu0 0
    %580 = vmatpush2.bf16.msra.mxu0 %v540
    %581 = vmatprep.subr.bf16.mxu0 0
    %582 = vmatpush2.bf16.msra.mxu0 %v539
    %583 = vmatprep.subr.bf16.mxu0 0
    %584 = vmatpush2.bf16.msra.mxu0 %v538
    %585 = vmatprep.subr.bf16.mxu0 0
    %586 = vmatpush2.bf16.msra.mxu0 %v537
    %587 = vmatprep.subr.bf16.mxu0 0
    %588 = vmatpush2.bf16.msra.mxu0 %v536
    %589 = vmatprep.subr.bf16.mxu0 0
    %590 = vmatpush2.bf16.msra.mxu0 %v535
    %591 = vmatprep.mubr.bf16.mxu0 %v336
    %592 = vmatmul.mubr.bf16.gmra.mxu0 %v335
    %v593 = vpop.f32.mrf.mxu0
    %v594 = vadd.f32 0.0, %v593
    %v595 = vpop.f32.mrf.mxu0
    %v596 = vpop.f32.mrf.mxu0
    %v597 = vadd.f32 0.0, %v596
    %v598 = vpop.f32.mrf.mxu0
    %599 = vmatprep.mubr.bf16.mxu0 %v338
    %600 = vmatmul.mubr.bf16.gmra.mxu0 %v337
    %v601 = vpop.f32.mrf.mxu0
    %v602 = vadd.f32 0.0, %v601
    %v603 = vpop.f32.mrf.mxu0
    %v604 = vpop.f32.mrf.mxu0
    %v605 = vadd.f32 0.0, %v604
    %v606 = vpop.f32.mrf.mxu0
    %607 = vmatprep.mubr.bf16.mxu0 %v340
    %608 = vmatmul.mubr.bf16.gmra.mxu0 %v339
    %v609 = vpop.f32.mrf.mxu0
    %v610 = vadd.f32 0.0, %v609
    %v611 = vpop.f32.mrf.mxu0
    %v612 = vpop.f32.mrf.mxu0
    %v613 = vadd.f32 0.0, %v612
    %v614 = vpop.f32.mrf.mxu0
    %615 = vmatprep.mubr.bf16.mxu0 %v342
    %616 = vmatmul.mubr.bf16.gmra.mxu0 %v341
    %v617 = vpop.f32.mrf.mxu0
    %v618 = vadd.f32 0.0, %v617
    %v619 = vpop.f32.mrf.mxu0
    %v620 = vpop.f32.mrf.mxu0
    %v621 = vadd.f32 0.0, %v620
    %v622 = vpop.f32.mrf.mxu0
    %623 = vmatprep.mubr.bf16.mxu0 %v344
    %624 = vmatmul.mubr.bf16.gmra.mxu0 %v343
    %v625 = vpop.f32.mrf.mxu0
    %v626 = vadd.f32 0.0, %v625
    %v627 = vpop.f32.mrf.mxu0
    %v628 = vpop.f32.mrf.mxu0
    %v629 = vadd.f32 0.0, %v628
    %v630 = vpop.f32.mrf.mxu0
    %631 = vmatprep.mubr.bf16.mxu0 %v346
    %632 = vmatmul.mubr.bf16.gmra.mxu0 %v345
    %v633 = vpop.f32.mrf.mxu0
    %v634 = vadd.f32 0.0, %v633
    %v635 = vpop.f32.mrf.mxu0
    %v636 = vpop.f32.mrf.mxu0
    %v637 = vadd.f32 0.0, %v636
    %v638 = vpop.f32.mrf.mxu0
    %639 = vmatprep.mubr.bf16.mxu0 %v348
    %640 = vmatmul.mubr.bf16.gmra.mxu0 %v347
    %v641 = vpop.f32.mrf.mxu0
    %v642 = vadd.f32 0.0, %v641
    %v643 = vpop.f32.mrf.mxu0
    %v644 = vpop.f32.mrf.mxu0
    %v645 = vadd.f32 0.0, %v644
    %v646 = vpop.f32.mrf.mxu0
    %647 = vmatprep.mubr.bf16.mxu0 %v350
    %648 = vmatmul.mubr.bf16.gmra.mxu0 %v349
    %v649 = vpop.f32.mrf.mxu0
    %v650 = vadd.f32 0.0, %v649
    %v651 = vpop.f32.mrf.mxu0
    %v652 = vpop.f32.mrf.mxu0
    %v653 = vadd.f32 0.0, %v652
    %v654 = vpop.f32.mrf.mxu0
    %655 = vmatprep.mubr.bf16.mxu0 %v352
    %656 = vmatmul.mubr.bf16.gmra.mxu0 %v351
    %v657 = vpop.f32.mrf.mxu0
    %v658 = vadd.f32 0.0, %v657
    %v659 = vpop.f32.mrf.mxu0
    %v660 = vpop.f32.mrf.mxu0
    %v661 = vadd.f32 0.0, %v660
    %v662 = vpop.f32.mrf.mxu0
    %663 = vmatprep.mubr.bf16.mxu0 %v354
    %664 = vmatmul.mubr.bf16.gmra.mxu0 %v353
    %v665 = vpop.f32.mrf.mxu0
    %v666 = vadd.f32 0.0, %v665
    %v667 = vpop.f32.mrf.mxu0
    %v668 = vpop.f32.mrf.mxu0
    %v669 = vadd.f32 0.0, %v668
    %v670 = vpop.f32.mrf.mxu0
    %671 = vmatprep.mubr.bf16.mxu0 %v356
    %672 = vmatmul.mubr.bf16.gmra.mxu0 %v355
    %v673 = vpop.f32.mrf.mxu0
    %v674 = vadd.f32 0.0, %v673
    %v675 = vpop.f32.mrf.mxu0
    %v676 = vpop.f32.mrf.mxu0
    %v677 = vadd.f32 0.0, %v676
    %v678 = vpop.f32.mrf.mxu0
    %679 = vmatprep.mubr.bf16.mxu0 %v358
    %680 = vmatmul.mubr.bf16.gmra.mxu0 %v357
    %v681 = vpop.f32.mrf.mxu0
    %v682 = vadd.f32 0.0, %v681
    %v683 = vpop.f32.mrf.mxu0
    %v684 = vpop.f32.mrf.mxu0
    %v685 = vadd.f32 0.0, %v684
    %v686 = vpop.f32.mrf.mxu0
    %687 = vmatprep.mubr.bf16.mxu0 %v360
    %688 = vmatmul.mubr.bf16.gmra.mxu0 %v359
    %v689 = vpop.f32.mrf.mxu0
    %v690 = vadd.f32 0.0, %v689
    %v691 = vpop.f32.mrf.mxu0
    %v692 = vpop.f32.mrf.mxu0
    %v693 = vadd.f32 0.0, %v692
    %v694 = vpop.f32.mrf.mxu0
    %695 = vmatprep.mubr.bf16.mxu0 %v362
    %696 = vmatmul.mubr.bf16.gmra.mxu0 %v361
    %v697 = vpop.f32.mrf.mxu0
    %v698 = vadd.f32 0.0, %v697
    %v699 = vpop.f32.mrf.mxu0
    %v700 = vpop.f32.mrf.mxu0
    %v701 = vadd.f32 0.0, %v700
    %v702 = vpop.f32.mrf.mxu0
    %703 = vmatprep.mubr.bf16.mxu0 %v364
    %704 = vmatmul.mubr.bf16.gmra.mxu0 %v363
    %v705 = vpop.f32.mrf.mxu0
    %v706 = vadd.f32 0.0, %v705
    %v707 = vpop.f32.mrf.mxu0
    %v708 = vpop.f32.mrf.mxu0
    %v709 = vadd.f32 0.0, %v708
    %v710 = vpop.f32.mrf.mxu0
    %711 = vmatprep.mubr.bf16.mxu0 %v366
    %712 = vmatmul.mubr.bf16.gmra.mxu0 %v365
    %v713 = vpop.f32.mrf.mxu0
    %v714 = vadd.f32 0.0, %v713
    %v715 = vpop.f32.mrf.mxu0
    %v716 = vpop.f32.mrf.mxu0
    %v717 = vadd.f32 0.0, %v716
    %v718 = vpop.f32.mrf.mxu0
    %719 = vmatprep.mubr.bf16.mxu0 %v368
    %720 = vmatmul.mubr.bf16.gmra.mxu0 %v367
    %v721 = vpop.f32.mrf.mxu0
    %v722 = vadd.f32 0.0, %v721
    %v723 = vpop.f32.mrf.mxu0
    %v724 = vpop.f32.mrf.mxu0
    %v725 = vadd.f32 0.0, %v724
    %v726 = vpop.f32.mrf.mxu0
    %727 = vmatprep.mubr.bf16.mxu0 %v370
    %728 = vmatmul.mubr.bf16.gmra.mxu0 %v369
    %v729 = vpop.f32.mrf.mxu0
    %v730 = vadd.f32 0.0, %v729
    %v731 = vpop.f32.mrf.mxu0
    %v732 = vpop.f32.mrf.mxu0
    %v733 = vadd.f32 0.0, %v732
    %v734 = vpop.f32.mrf.mxu0
    %735 = vmatprep.mubr.bf16.mxu0 %v372
    %736 = vmatmul.mubr.bf16.gmra.mxu0 %v371
    %v737 = vpop.f32.mrf.mxu0
    %v738 = vadd.f32 0.0, %v737
    %v739 = vpop.f32.mrf.mxu0
    %v740 = vpop.f32.mrf.mxu0
    %v741 = vadd.f32 0.0, %v740
    %v742 = vpop.f32.mrf.mxu0
    %743 = vmatprep.mubr.bf16.mxu0 %v374
    %744 = vmatmul.mubr.bf16.gmra.mxu0 %v373
    %v745 = vpop.f32.mrf.mxu0
    %v746 = vadd.f32 0.0, %v745
    %v747 = vpop.f32.mrf.mxu0
    %v748 = vpop.f32.mrf.mxu0
    %v749 = vadd.f32 0.0, %v748
    %v750 = vpop.f32.mrf.mxu0
    %751 = vmatprep.mubr.bf16.mxu0 %v376
    %752 = vmatmul.mubr.bf16.gmra.mxu0 %v375
    %v753 = vpop.f32.mrf.mxu0
    %v754 = vadd.f32 0.0, %v753
    %v755 = vpop.f32.mrf.mxu0
    %v756 = vpop.f32.mrf.mxu0
    %v757 = vadd.f32 0.0, %v756
    %v758 = vpop.f32.mrf.mxu0
    %759 = vmatprep.mubr.bf16.mxu0 %v378
    %760 = vmatmul.mubr.bf16.gmra.mxu0 %v377
    %v761 = vpop.f32.mrf.mxu0
    %v762 = vadd.f32 0.0, %v761
    %v763 = vpop.f32.mrf.mxu0
    %v764 = vpop.f32.mrf.mxu0
    %v765 = vadd.f32 0.0, %v764
    %v766 = vpop.f32.mrf.mxu0
    %767 = vmatprep.mubr.bf16.mxu0 %v380
    %768 = vmatmul.mubr.bf16.gmra.mxu0 %v379
    %v769 = vpop.f32.mrf.mxu0
    %v770 = vadd.f32 0.0, %v769
    %v771 = vpop.f32.mrf.mxu0
    %v772 = vpop.f32.mrf.mxu0
    %v773 = vadd.f32 0.0, %v772
    %v774 = vpop.f32.mrf.mxu0
    %775 = vmatprep.mubr.bf16.mxu0 %v382
    %776 = vmatmul.mubr.bf16.gmra.mxu0 %v381
    %v777 = vpop.f32.mrf.mxu0
    %v778 = vadd.f32 0.0, %v777
    %v779 = vpop.f32.mrf.mxu0
    %v780 = vpop.f32.mrf.mxu0
    %v781 = vadd.f32 0.0, %v780
    %v782 = vpop.f32.mrf.mxu0
    %783 = vmatprep.mubr.bf16.mxu0 %v384
    %784 = vmatmul.mubr.bf16.gmra.mxu0 %v383
    %v785 = vpop.f32.mrf.mxu0
    %v786 = vadd.f32 0.0, %v785
    %v787 = vpop.f32.mrf.mxu0
    %v788 = vpop.f32.mrf.mxu0
    %v789 = vadd.f32 0.0, %v788
    %v790 = vpop.f32.mrf.mxu0
    %791 = vmatprep.mubr.bf16.mxu0 %v386
    %792 = vmatmul.mubr.bf16.gmra.mxu0 %v385
    %v793 = vpop.f32.mrf.mxu0
    %v794 = vadd.f32 0.0, %v793
    %v795 = vpop.f32.mrf.mxu0
    %v796 = vpop.f32.mrf.mxu0
    %v797 = vadd.f32 0.0, %v796
    %v798 = vpop.f32.mrf.mxu0
    %799 = vmatprep.mubr.bf16.mxu0 %v388
    %800 = vmatmul.mubr.bf16.gmra.mxu0 %v387
    %v801 = vpop.f32.mrf.mxu0
    %v802 = vadd.f32 0.0, %v801
    %v803 = vpop.f32.mrf.mxu0
    %v804 = vpop.f32.mrf.mxu0
    %v805 = vadd.f32 0.0, %v804
    %v806 = vpop.f32.mrf.mxu0
    %807 = vmatprep.mubr.bf16.mxu0 %v390
    %808 = vmatmul.mubr.bf16.gmra.mxu0 %v389
    %v809 = vpop.f32.mrf.mxu0
    %v810 = vadd.f32 0.0, %v809
    %v811 = vpop.f32.mrf.mxu0
    %v812 = vpop.f32.mrf.mxu0
    %v813 = vadd.f32 0.0, %v812
    %v814 = vpop.f32.mrf.mxu0
    %815 = vmatprep.mubr.bf16.mxu0 %v392
    %816 = vmatmul.mubr.bf16.gmra.mxu0 %v391
    %v817 = vpop.f32.mrf.mxu0
    %v818 = vadd.f32 0.0, %v817
    %v819 = vpop.f32.mrf.mxu0
    %v820 = vpop.f32.mrf.mxu0
    %v821 = vadd.f32 0.0, %v820
    %v822 = vpop.f32.mrf.mxu0
    %823 = vmatprep.mubr.bf16.mxu0 %v394
    %824 = vmatmul.mubr.bf16.gmra.mxu0 %v393
    %v825 = vpop.f32.mrf.mxu0
    %v826 = vadd.f32 0.0, %v825
    %v827 = vpop.f32.mrf.mxu0
    %v828 = vpop.f32.mrf.mxu0
    %v829 = vadd.f32 0.0, %v828
    %v830 = vpop.f32.mrf.mxu0
    %831 = vmatprep.mubr.bf16.mxu0 %v396
    %832 = vmatmul.mubr.bf16.gmra.mxu0 %v395
    %v833 = vpop.f32.mrf.mxu0
    %v834 = vadd.f32 0.0, %v833
    %v835 = vpop.f32.mrf.mxu0
    %v836 = vpop.f32.mrf.mxu0
    %v837 = vadd.f32 0.0, %v836
    %v838 = vpop.f32.mrf.mxu0
    %839 = vmatprep.mubr.bf16.mxu0 %v398
    %840 = vmatmul.mubr.bf16.gmra.mxu0 %v397
    %v841 = vpop.f32.mrf.mxu0
    %v842 = vadd.f32 0.0, %v841
    %v843 = vpop.f32.mrf.mxu0
    %v844 = vpop.f32.mrf.mxu0
    %v845 = vadd.f32 0.0, %v844
    %v846 = vpop.f32.mrf.mxu0
    %847 = vdwg.mxu0
    %v848 = vld [vmem:[%s2] sm:$0x1]
    %v850 = vlaneseq
    %v851 = vshrl.u32 %v850, 7
    %v852 = vsub.s32 0, %v851
    %v853 = vrot.slane %v848, %v852
    %v855 = vmul.f32 %v594, %v853
    %v856 = vmul.f32 %v597, %v853
    %v857 = vmul.f32 %v602, %v853
    %v858 = vmul.f32 %v605, %v853
    %v859 = vmul.f32 %v610, %v853
    %v860 = vmul.f32 %v613, %v853
    %v861 = vmul.f32 %v618, %v853
    %v862 = vmul.f32 %v621, %v853
    %v863 = vmul.f32 %v626, %v853
    %v864 = vmul.f32 %v629, %v853
    %v865 = vmul.f32 %v634, %v853
    %v866 = vmul.f32 %v637, %v853
    %v867 = vmul.f32 %v642, %v853
    %v868 = vmul.f32 %v645, %v853
    %v869 = vmul.f32 %v650, %v853
    %v870 = vmul.f32 %v653, %v853
    %v871 = vmul.f32 %v658, %v853
    %v872 = vmul.f32 %v661, %v853
    %v873 = vmul.f32 %v666, %v853
    %v874 = vmul.f32 %v669, %v853
    %v875 = vmul.f32 %v674, %v853
    %v876 = vmul.f32 %v677, %v853
    %v877 = vmul.f32 %v682, %v853
    %v878 = vmul.f32 %v685, %v853
    %v879 = vmul.f32 %v690, %v853
    %v880 = vmul.f32 %v693, %v853
    %v881 = vmul.f32 %v698, %v853
    %v882 = vmul.f32 %v701, %v853
    %v883 = vmul.f32 %v706, %v853
    %v884 = vmul.f32 %v709, %v853
    %v885 = vmul.f32 %v714, %v853
    %v886 = vmul.f32 %v717, %v853
    %v887 = vmul.f32 %v722, %v853
    %v888 = vmul.f32 %v725, %v853
    %v889 = vmul.f32 %v730, %v853
    %v890 = vmul.f32 %v733, %v853
    %v891 = vmul.f32 %v738, %v853
    %v892 = vmul.f32 %v741, %v853
    %v893 = vmul.f32 %v746, %v853
    %v894 = vmul.f32 %v749, %v853
    %v895 = vmul.f32 %v754, %v853
    %v896 = vmul.f32 %v757, %v853
    %v897 = vmul.f32 %v762, %v853
    %v898 = vmul.f32 %v765, %v853
    %v899 = vmul.f32 %v770, %v853
    %v900 = vmul.f32 %v773, %v853
    %v901 = vmul.f32 %v778, %v853
    %v902 = vmul.f32 %v781, %v853
    %v903 = vmul.f32 %v786, %v853
    %v904 = vmul.f32 %v789, %v853
    %v905 = vmul.f32 %v794, %v853
    %v906 = vmul.f32 %v797, %v853
    %v907 = vmul.f32 %v802, %v853
    %v908 = vmul.f32 %v805, %v853
    %v909 = vmul.f32 %v810, %v853
    %v910 = vmul.f32 %v813, %v853
    %v911 = vmul.f32 %v818, %v853
    %v912 = vmul.f32 %v821, %v853
    %v913 = vmul.f32 %v826, %v853
    %v914 = vmul.f32 %v829, %v853
    %v915 = vmul.f32 %v834, %v853
    %v916 = vmul.f32 %v837, %v853
    %v917 = vmul.f32 %v842, %v853
    %v918 = vmul.f32 %v845, %v853
    %v919 = vld [vmem:[%s3] sm:$0x1]
    %v921 = vlaneseq
    %v922 = vshrl.u32 %v921, 7
    %v923 = vsub.s32 0, %v922
    %v924 = vrot.slane %v919, %v923
    %v926 = vadd.f32 %v855, %v924
    %v927 = vadd.f32 %v856, %v924
    %v928 = vadd.f32 %v857, %v924
    %v929 = vadd.f32 %v858, %v924
    %v930 = vadd.f32 %v859, %v924
    %v931 = vadd.f32 %v860, %v924
    %v932 = vadd.f32 %v861, %v924
    %v933 = vadd.f32 %v862, %v924
    %v934 = vadd.f32 %v863, %v924
    %v935 = vadd.f32 %v864, %v924
    %v936 = vadd.f32 %v865, %v924
    %v937 = vadd.f32 %v866, %v924
    %v938 = vadd.f32 %v867, %v924
    %v939 = vadd.f32 %v868, %v924
    %v940 = vadd.f32 %v869, %v924
    %v941 = vadd.f32 %v870, %v924
    %v942 = vadd.f32 %v871, %v924
    %v943 = vadd.f32 %v872, %v924
    %v944 = vadd.f32 %v873, %v924
    %v945 = vadd.f32 %v874, %v924
    %v946 = vadd.f32 %v875, %v924
    %v947 = vadd.f32 %v876, %v924
    %v948 = vadd.f32 %v877, %v924
    %v949 = vadd.f32 %v878, %v924
    %v950 = vadd.f32 %v879, %v924
    %v951 = vadd.f32 %v880, %v924
    %v952 = vadd.f32 %v881, %v924
    %v953 = vadd.f32 %v882, %v924
    %v954 = vadd.f32 %v883, %v924
    %v955 = vadd.f32 %v884, %v924
    %v956 = vadd.f32 %v885, %v924
    %v957 = vadd.f32 %v886, %v924
    %v958 = vadd.f32 %v887, %v924
    %v959 = vadd.f32 %v888, %v924
    %v960 = vadd.f32 %v889, %v924
    %v961 = vadd.f32 %v890, %v924
    %v962 = vadd.f32 %v891, %v924
    %v963 = vadd.f32 %v892, %v924
    %v964 = vadd.f32 %v893, %v924
    %v965 = vadd.f32 %v894, %v924
    %v966 = vadd.f32 %v895, %v924
    %v967 = vadd.f32 %v896, %v924
    %v968 = vadd.f32 %v897, %v924
    %v969 = vadd.f32 %v898, %v924
    %v970 = vadd.f32 %v899, %v924
    %v971 = vadd.f32 %v900, %v924
    %v972 = vadd.f32 %v901, %v924
    %v973 = vadd.f32 %v902, %v924
    %v974 = vadd.f32 %v903, %v924
    %v975 = vadd.f32 %v904, %v924
    %v976 = vadd.f32 %v905, %v924
    %v977 = vadd.f32 %v906, %v924
    %v978 = vadd.f32 %v907, %v924
    %v979 = vadd.f32 %v908, %v924
    %v980 = vadd.f32 %v909, %v924
    %v981 = vadd.f32 %v910, %v924
    %v982 = vadd.f32 %v911, %v924
    %v983 = vadd.f32 %v912, %v924
    %v984 = vadd.f32 %v913, %v924
    %v985 = vadd.f32 %v914, %v924
    %v986 = vadd.f32 %v915, %v924
    %v987 = vadd.f32 %v916, %v924
    %v988 = vadd.f32 %v917, %v924
    %v989 = vadd.f32 %v918, %v924
    %v990 = vmax.f32 %v926, 0.0
    %v991 = vmax.f32 %v927, 0.0
    %v992 = vmax.f32 %v928, 0.0
    %v993 = vmax.f32 %v929, 0.0
    %v994 = vmax.f32 %v930, 0.0
    %v995 = vmax.f32 %v931, 0.0
    %v996 = vmax.f32 %v932, 0.0
    %v997 = vmax.f32 %v933, 0.0
    %v998 = vmax.f32 %v934, 0.0
    %v999 = vmax.f32 %v935, 0.0
    %v1000 = vmax.f32 %v936, 0.0
    %v1001 = vmax.f32 %v937, 0.0
    %v1002 = vmax.f32 %v938, 0.0
    %v1003 = vmax.f32 %v939, 0.0
    %v1004 = vmax.f32 %v940, 0.0
    %v1005 = vmax.f32 %v941, 0.0
    %v1006 = vmax.f32 %v942, 0.0
    %v1007 = vmax.f32 %v943, 0.0
    %v1008 = vmax.f32 %v944, 0.0
    %v1009 = vmax.f32 %v945, 0.0
    %v1010 = vmax.f32 %v946, 0.0
    %v1011 = vmax.f32 %v947, 0.0
    %v1012 = vmax.f32 %v948, 0.0
    %v1013 = vmax.f32 %v949, 0.0
    %v1014 = vmax.f32 %v950, 0.0
    %v1015 = vmax.f32 %v951, 0.0
    %v1016 = vmax.f32 %v952, 0.0
    %v1017 = vmax.f32 %v953, 0.0
    %v1018 = vmax.f32 %v954, 0.0
    %v1019 = vmax.f32 %v955, 0.0
    %v1020 = vmax.f32 %v956, 0.0
    %v1021 = vmax.f32 %v957, 0.0
    %v1022 = vmax.f32 %v958, 0.0
    %v1023 = vmax.f32 %v959, 0.0
    %v1024 = vmax.f32 %v960, 0.0
    %v1025 = vmax.f32 %v961, 0.0
    %v1026 = vmax.f32 %v962, 0.0
    %v1027 = vmax.f32 %v963, 0.0
    %v1028 = vmax.f32 %v964, 0.0
    %v1029 = vmax.f32 %v965, 0.0
    %v1030 = vmax.f32 %v966, 0.0
    %v1031 = vmax.f32 %v967, 0.0
    %v1032 = vmax.f32 %v968, 0.0
    %v1033 = vmax.f32 %v969, 0.0
    %v1034 = vmax.f32 %v970, 0.0
    %v1035 = vmax.f32 %v971, 0.0
    %v1036 = vmax.f32 %v972, 0.0
    %v1037 = vmax.f32 %v973, 0.0
    %v1038 = vmax.f32 %v974, 0.0
    %v1039 = vmax.f32 %v975, 0.0
    %v1040 = vmax.f32 %v976, 0.0
    %v1041 = vmax.f32 %v977, 0.0
    %v1042 = vmax.f32 %v978, 0.0
    %v1043 = vmax.f32 %v979, 0.0
    %v1044 = vmax.f32 %v980, 0.0
    %v1045 = vmax.f32 %v981, 0.0
    %v1046 = vmax.f32 %v982, 0.0
    %v1047 = vmax.f32 %v983, 0.0
    %v1048 = vmax.f32 %v984, 0.0
    %v1049 = vmax.f32 %v985, 0.0
    %v1050 = vmax.f32 %v986, 0.0
    %v1051 = vmax.f32 %v987, 0.0
    %v1052 = vmax.f32 %v988, 0.0
    %v1053 = vmax.f32 %v989, 0.0
    %v1054 = vpack.c.bf16 %v991, %v990
    %v1055 = vpack.c.bf16 %v993, %v992
    %v1056 = vpack.c.bf16 %v995, %v994
    %v1057 = vpack.c.bf16 %v997, %v996
    %v1058 = vpack.c.bf16 %v999, %v998
    %v1059 = vpack.c.bf16 %v1001, %v1000
    %v1060 = vpack.c.bf16 %v1003, %v1002
    %v1061 = vpack.c.bf16 %v1005, %v1004
    %v1062 = vpack.c.bf16 %v1007, %v1006
    %v1063 = vpack.c.bf16 %v1009, %v1008
    %v1064 = vpack.c.bf16 %v1011, %v1010
    %v1065 = vpack.c.bf16 %v1013, %v1012
    %v1066 = vpack.c.bf16 %v1015, %v1014
    %v1067 = vpack.c.bf16 %v1017, %v1016
    %v1068 = vpack.c.bf16 %v1019, %v1018
    %v1069 = vpack.c.bf16 %v1021, %v1020
    %v1070 = vpack.c.bf16 %v1023, %v1022
    %v1071 = vpack.c.bf16 %v1025, %v1024
    %v1072 = vpack.c.bf16 %v1027, %v1026
    %v1073 = vpack.c.bf16 %v1029, %v1028
    %v1074 = vpack.c.bf16 %v1031, %v1030
    %v1075 = vpack.c.bf16 %v1033, %v1032
    %v1076 = vpack.c.bf16 %v1035, %v1034
    %v1077 = vpack.c.bf16 %v1037, %v1036
    %v1078 = vpack.c.bf16 %v1039, %v1038
    %v1079 = vpack.c.bf16 %v1041, %v1040
    %v1080 = vpack.c.bf16 %v1043, %v1042
    %v1081 = vpack.c.bf16 %v1045, %v1044
    %v1082 = vpack.c.bf16 %v1047, %v1046
    %v1083 = vpack.c.bf16 %v1049, %v1048
    %v1084 = vpack.c.bf16 %v1051, %v1050
    %v1085 = vpack.c.bf16 %v1053, %v1052
    %v1118 = vunpack.c.l.b16 %v1054
    %v1119 = vunpack.c.h.b16 %v1054
    %v1120 = vunpack.c.l.b16 %v1055
    %v1121 = vunpack.c.h.b16 %v1055
    %v1122 = vunpack.c.l.b16 %v1056
    %v1123 = vunpack.c.h.b16 %v1056
    %v1124 = vunpack.c.l.b16 %v1057
    %v1125 = vunpack.c.h.b16 %v1057
    %v1126 = vunpack.c.l.b16 %v1058
    %v1127 = vunpack.c.h.b16 %v1058
    %v1128 = vunpack.c.l.b16 %v1059
    %v1129 = vunpack.c.h.b16 %v1059
    %v1130 = vunpack.c.l.b16 %v1060
    %v1131 = vunpack.c.h.b16 %v1060
    %v1132 = vunpack.c.l.b16 %v1061
    %v1133 = vunpack.c.h.b16 %v1061
    %v1134 = vunpack.c.l.b16 %v1062
    %v1135 = vunpack.c.h.b16 %v1062
    %v1136 = vunpack.c.l.b16 %v1063
    %v1137 = vunpack.c.h.b16 %v1063
    %v1138 = vunpack.c.l.b16 %v1064
    %v1139 = vunpack.c.h.b16 %v1064
    %v1140 = vunpack.c.l.b16 %v1065
    %v1141 = vunpack.c.h.b16 %v1065
    %v1142 = vunpack.c.l.b16 %v1066
    %v1143 = vunpack.c.h.b16 %v1066
    %v1144 = vunpack.c.l.b16 %v1067
    %v1145 = vunpack.c.h.b16 %v1067
    %v1146 = vunpack.c.l.b16 %v1068
    %v1147 = vunpack.c.h.b16 %v1068
    %v1148 = vunpack.c.l.b16 %v1069
    %v1149 = vunpack.c.h.b16 %v1069
    %v1150 = vunpack.c.l.b16 %v1070
    %v1151 = vunpack.c.h.b16 %v1070
    %v1152 = vunpack.c.l.b16 %v1071
    %v1153 = vunpack.c.h.b16 %v1071
    %v1154 = vunpack.c.l.b16 %v1072
    %v1155 = vunpack.c.h.b16 %v1072
    %v1156 = vunpack.c.l.b16 %v1073
    %v1157 = vunpack.c.h.b16 %v1073
    %v1158 = vunpack.c.l.b16 %v1074
    %v1159 = vunpack.c.h.b16 %v1074
    %v1160 = vunpack.c.l.b16 %v1075
    %v1161 = vunpack.c.h.b16 %v1075
    %v1162 = vunpack.c.l.b16 %v1076
    %v1163 = vunpack.c.h.b16 %v1076
    %v1164 = vunpack.c.l.b16 %v1077
    %v1165 = vunpack.c.h.b16 %v1077
    %v1166 = vunpack.c.l.b16 %v1078
    %v1167 = vunpack.c.h.b16 %v1078
    %v1168 = vunpack.c.l.b16 %v1079
    %v1169 = vunpack.c.h.b16 %v1079
    %v1170 = vunpack.c.l.b16 %v1080
    %v1171 = vunpack.c.h.b16 %v1080
    %v1172 = vunpack.c.l.b16 %v1081
    %v1173 = vunpack.c.h.b16 %v1081
    %v1174 = vunpack.c.l.b16 %v1082
    %v1175 = vunpack.c.h.b16 %v1082
    %v1176 = vunpack.c.l.b16 %v1083
    %v1177 = vunpack.c.h.b16 %v1083
    %v1178 = vunpack.c.l.b16 %v1084
    %v1179 = vunpack.c.h.b16 %v1084
    %v1180 = vunpack.c.l.b16 %v1085
    %v1181 = vunpack.c.h.b16 %v1085
    %v1182 = vpack.c.b16 %v1118, %v1118
    %v1183 = vpack.c.b16 %v1119, %v1119
    %v1184 = vpack.c.b16 %v1120, %v1120
    %v1185 = vpack.c.b16 %v1121, %v1121
    %v1186 = vpack.c.b16 %v1122, %v1122
    %v1187 = vpack.c.b16 %v1123, %v1123
    %v1188 = vpack.c.b16 %v1124, %v1124
    %v1189 = vpack.c.b16 %v1125, %v1125
    %v1190 = vpack.c.b16 %v1126, %v1126
    %v1191 = vpack.c.b16 %v1127, %v1127
    %v1192 = vpack.c.b16 %v1128, %v1128
    %v1193 = vpack.c.b16 %v1129, %v1129
    %v1194 = vpack.c.b16 %v1130, %v1130
    %v1195 = vpack.c.b16 %v1131, %v1131
    %v1196 = vpack.c.b16 %v1132, %v1132
    %v1197 = vpack.c.b16 %v1133, %v1133
    %v1198 = vpack.c.b16 %v1134, %v1134
    %v1199 = vpack.c.b16 %v1135, %v1135
    %v1200 = vpack.c.b16 %v1136, %v1136
    %v1201 = vpack.c.b16 %v1137, %v1137
    %v1202 = vpack.c.b16 %v1138, %v1138
    %v1203 = vpack.c.b16 %v1139, %v1139
    %v1204 = vpack.c.b16 %v1140, %v1140
    %v1205 = vpack.c.b16 %v1141, %v1141
    %v1206 = vpack.c.b16 %v1142, %v1142
    %v1207 = vpack.c.b16 %v1143, %v1143
    %v1208 = vpack.c.b16 %v1144, %v1144
    %v1209 = vpack.c.b16 %v1145, %v1145
    %v1210 = vpack.c.b16 %v1146, %v1146
    %v1211 = vpack.c.b16 %v1147, %v1147
    %v1212 = vpack.c.b16 %v1148, %v1148
    %v1213 = vpack.c.b16 %v1149, %v1149
    %v1214 = vpack.c.b16 %v1150, %v1150
    %v1215 = vpack.c.b16 %v1151, %v1151
    %v1216 = vpack.c.b16 %v1152, %v1152
    %v1217 = vpack.c.b16 %v1153, %v1153
    %v1218 = vpack.c.b16 %v1154, %v1154
    %v1219 = vpack.c.b16 %v1155, %v1155
    %v1220 = vpack.c.b16 %v1156, %v1156
    %v1221 = vpack.c.b16 %v1157, %v1157
    %v1222 = vpack.c.b16 %v1158, %v1158
    %v1223 = vpack.c.b16 %v1159, %v1159
    %v1224 = vpack.c.b16 %v1160, %v1160
    %v1225 = vpack.c.b16 %v1161, %v1161
    %v1226 = vpack.c.b16 %v1162, %v1162
    %v1227 = vpack.c.b16 %v1163, %v1163
    %v1228 = vpack.c.b16 %v1164, %v1164
    %v1229 = vpack.c.b16 %v1165, %v1165
    %v1230 = vpack.c.b16 %v1166, %v1166
    %v1231 = vpack.c.b16 %v1167, %v1167
    %v1232 = vpack.c.b16 %v1168, %v1168
    %v1233 = vpack.c.b16 %v1169, %v1169
    %v1234 = vpack.c.b16 %v1170, %v1170
    %v1235 = vpack.c.b16 %v1171, %v1171
    %v1236 = vpack.c.b16 %v1172, %v1172
    %v1237 = vpack.c.b16 %v1173, %v1173
    %v1238 = vpack.c.b16 %v1174, %v1174
    %v1239 = vpack.c.b16 %v1175, %v1175
    %v1240 = vpack.c.b16 %v1176, %v1176
    %v1241 = vpack.c.b16 %v1177, %v1177
    %v1242 = vpack.c.b16 %v1178, %v1178
    %v1243 = vpack.c.b16 %v1179, %v1179
    %v1244 = vpack.c.b16 %v1180, %v1180
    %v1245 = vpack.c.b16 %v1181, %v1181
    %1310 = vst [vmem:[#allocation7] sm:$0xf] %v1182
    %1311 = vst [vmem:[#allocation7 + $0x4] sm:$0xf] %v1183
    %1312 = vst [vmem:[#allocation7 + $0x8] sm:$0xf] %v1184
    %1313 = vst [vmem:[#allocation7 + $0xc] sm:$0xf] %v1185
    %1314 = vst [vmem:[#allocation7 + $0x10] sm:$0xf] %v1186
    %1315 = vst [vmem:[#allocation7 + $0x14] sm:$0xf] %v1187
    %1316 = vst [vmem:[#allocation7 + $0x18] sm:$0xf] %v1188
    %1317 = vst [vmem:[#allocation7 + $0x1c] sm:$0xf] %v1189
    %1318 = vst [vmem:[#allocation7 + $0x20] sm:$0xf] %v1190
    %1319 = vst [vmem:[#allocation7 + $0x24] sm:$0xf] %v1191
    %1320 = vst [vmem:[#allocation7 + $0x28] sm:$0xf] %v1192
    %1321 = vst [vmem:[#allocation7 + $0x2c] sm:$0xf] %v1193
    %1322 = vst [vmem:[#allocation7 + $0x30] sm:$0xf] %v1194
    %1323 = vst [vmem:[#allocation7 + $0x34] sm:$0xf] %v1195
    %1324 = vst [vmem:[#allocation7 + $0x38] sm:$0xf] %v1196
    %1325 = vst [vmem:[#allocation7 + $0x3c] sm:$0xf] %v1197
    %1326 = vst [vmem:[#allocation7 + $0x40] sm:$0xf] %v1198
    %1327 = vst [vmem:[#allocation7 + $0x44] sm:$0xf] %v1199
    %1328 = vst [vmem:[#allocation7 + $0x48] sm:$0xf] %v1200
    %1329 = vst [vmem:[#allocation7 + $0x4c] sm:$0xf] %v1201
    %1330 = vst [vmem:[#allocation7 + $0x50] sm:$0xf] %v1202
    %1331 = vst [vmem:[#allocation7 + $0x54] sm:$0xf] %v1203
    %1332 = vst [vmem:[#allocation7 + $0x58] sm:$0xf] %v1204
    %1333 = vst [vmem:[#allocation7 + $0x5c] sm:$0xf] %v1205
    %1334 = vst [vmem:[#allocation7 + $0x60] sm:$0xf] %v1206
    %1335 = vst [vmem:[#allocation7 + $0x64] sm:$0xf] %v1207
    %1336 = vst [vmem:[#allocation7 + $0x68] sm:$0xf] %v1208
    %1337 = vst [vmem:[#allocation7 + $0x6c] sm:$0xf] %v1209
    %1338 = vst [vmem:[#allocation7 + $0x70] sm:$0xf] %v1210
    %1339 = vst [vmem:[#allocation7 + $0x74] sm:$0xf] %v1211
    %1340 = vst [vmem:[#allocation7 + $0x78] sm:$0xf] %v1212
    %1341 = vst [vmem:[#allocation7 + $0x7c] sm:$0xf] %v1213
    %1342 = vst [vmem:[#allocation7 + $0x80] sm:$0xf] %v1214
    %1343 = vst [vmem:[#allocation7 + $0x84] sm:$0xf] %v1215
    %1344 = vst [vmem:[#allocation7 + $0x88] sm:$0xf] %v1216
    %1345 = vst [vmem:[#allocation7 + $0x8c] sm:$0xf] %v1217
    %1346 = vst [vmem:[#allocation7 + $0x90] sm:$0xf] %v1218
    %1347 = vst [vmem:[#allocation7 + $0x94] sm:$0xf] %v1219
    %1348 = vst [vmem:[#allocation7 + $0x98] sm:$0xf] %v1220
    %1349 = vst [vmem:[#allocation7 + $0x9c] sm:$0xf] %v1221
    %1350 = vst [vmem:[#allocation7 + $0xa0] sm:$0xf] %v1222
    %1351 = vst [vmem:[#allocation7 + $0xa4] sm:$0xf] %v1223
    %1352 = vst [vmem:[#allocation7 + $0xa8] sm:$0xf] %v1224
    %1353 = vst [vmem:[#allocation7 + $0xac] sm:$0xf] %v1225
    %1354 = vst [vmem:[#allocation7 + $0xb0] sm:$0xf] %v1226
    %1355 = vst [vmem:[#allocation7 + $0xb4] sm:$0xf] %v1227
    %1356 = vst [vmem:[#allocation7 + $0xb8] sm:$0xf] %v1228
    %1357 = vst [vmem:[#allocation7 + $0xbc] sm:$0xf] %v1229
    %1358 = vst [vmem:[#allocation7 + $0xc0] sm:$0xf] %v1230
    %1359 = vst [vmem:[#allocation7 + $0xc4] sm:$0xf] %v1231
    %1360 = vst [vmem:[#allocation7 + $0xc8] sm:$0xf] %v1232
    %1361 = vst [vmem:[#allocation7 + $0xcc] sm:$0xf] %v1233
    %1362 = vst [vmem:[#allocation7 + $0xd0] sm:$0xf] %v1234
    %1363 = vst [vmem:[#allocation7 + $0xd4] sm:$0xf] %v1235
    %1364 = vst [vmem:[#allocation7 + $0xd8] sm:$0xf] %v1236
    %1365 = vst [vmem:[#allocation7 + $0xdc] sm:$0xf] %v1237
    %1366 = vst [vmem:[#allocation7 + $0xe0] sm:$0xf] %v1238
    %1367 = vst [vmem:[#allocation7 + $0xe4] sm:$0xf] %v1239
    %1368 = vst [vmem:[#allocation7 + $0xe8] sm:$0xf] %v1240
    %1369 = vst [vmem:[#allocation7 + $0xec] sm:$0xf] %v1241
    %1370 = vst [vmem:[#allocation7 + $0xf0] sm:$0xf] %v1242
    %1371 = vst [vmem:[#allocation7 + $0xf4] sm:$0xf] %v1243
    %1372 = vst [vmem:[#allocation7 + $0xf8] sm:$0xf] %v1244
    %1373 = vst [vmem:[#allocation7 + $0xfc] sm:$0xf] %v1245
    // Predicated region
    $region26: #{tpu_custom_call.1} parent=1 // pred_check
      _
    $region27: #{tpu_custom_call.1} parent=1 // pred_check_branch
      %1375 = sbr.rel (0) target = $region29
    $region28: #{tpu_custom_call.1} parent=1 // pred_region
      %s1377 = ssub.s32 4096, 4096
      %1378 = vsyncadd [#allocation4], %s1377
      %s1379 = sshll.u32 [#allocation7], 4
      %s1380 = int_to_ptr.vmem [resolvable:$true] %s1379
      %1385 = dma.vmem_to_hbm [thread:$0]  %s1380, 4096, %s4, [#allocation4], 64, 64, 4
    $region29: #{tpu_custom_call.1} parent=1 // pred_fallthru
      _
    // Predicated region
    $region30: #{tpu_custom_call.1} parent=1 // pred_check
      _
    $region31: #{tpu_custom_call.1} parent=1 // pred_check_branch
      %1387 = sbr.rel (0) target = $region33
    $region32: #{tpu_custom_call.1} parent=1 // pred_region
      %1388 = dma.done [#allocation4], 4096
    $region33: #{tpu_custom_call.1} parent=1 // pred_fallthru
      _
    %1389 = vsyncpa [#allocation3], 1
    %1390 = vsyncpa [#allocation6], 1
    %1391 = vsyncpa [#allocation4], 1

</llo_original>
